<compile_context>
chip_gen: v7x
topology: tpu7x:2x2x1
jax: 0.10.0
libtpu: 0.0.40
codegen_flags: <defaults>
</compile_context>

<pallas_src>
import functools
import math

import jax
import jax.numpy as jnp
from jax.experimental import pallas as pl
from jax.experimental.pallas import tpu as pltpu


def _round_up(x, m):
    return ((x + m - 1) // m) * m


def _activation(h, act_fun):
    if act_fun is None:
        return h
    if act_fun == "relu":
        return jnp.maximum(h, 0.0)
    if act_fun == "gelu":
        # Exact erf-gelu to match the module; use "gelu_new" for the cheaper
        # tanh approximation (EUP path).
        return jax.nn.gelu(h, approximate=False)
    if act_fun == "gelu_new":
        return jax.nn.gelu(h, approximate=True)
    if act_fun == "swish":
        return h * jax.nn.sigmoid(h)
    if act_fun == "tanh":
        return jnp.tanh(h)
    raise ValueError(f"unsupported act_fun: {act_fun}")


def fc_kernel(x_ref, w_ref, b_ref, o_ref, acc_ref, *, act_fun):
    # x_ref: [tm, tk], w_ref: [tk, tn], b_ref: [1, tn], o_ref: [tm, tn]
    # acc_ref: [tm, tn] f32 scratch, persistent across the K grid axis.
    k = pl.program_id(2)

    @pl.when(k == 0)
    def _():
        acc_ref[...] = jnp.zeros_like(acc_ref)

    # Matmul in the operand dtype (bf16 operands -> single-pass bf16 MXU),
    # accumulate in f32.
    acc_ref[...] += jnp.dot(x_ref[...], w_ref[...],
                            preferred_element_type=jnp.float32)

    @pl.when(k == pl.num_programs(2) - 1)
    def _():
        h = acc_ref[...] + b_ref[...].astype(jnp.float32)
        h = _activation(h, act_fun)
        # TODO(synk): dropout_r > 0 (training-mode Bernoulli masking via
        # pltpu.prng_seed / prng_random_bits) not implemented; module default
        # dropout_r = 0 is identity.
        o_ref[...] = h.astype(o_ref.dtype)


def prepare_linear_weight(weight):
    """One-time (init) conversion of a torch-layout [out, in] weight to [in, out]."""
    return jnp.asarray(weight).T


def _vmem_limit_bytes():
    # ~25% headroom below physical VMEM: ~48 MiB on v7x, ~96 MiB on v5e/v6e.
    try:
        cap = getattr(pltpu.get_tpu_info(), "vmem_capacity_bytes", None)
        if cap:
            return int(cap) * 3 // 4
    except Exception:
        pass
    return 64 * 1024 * 1024


def fc_forward(x, w_t, bias, *, act_fun="relu", dropout_r=0.0,
               tile_m=256, tile_n=256, tile_k=512):
    """FC forward.

    x:    [..., in_size]        (any leading dims; f32 or bf16)
    w_t:  [in_size, out_size]   (pre-transposed once at init, see
                                 prepare_linear_weight; no per-call weight.T)
    bias: [out_size]
    """
    if dropout_r > 0:
        # TODO(synk): in-kernel dropout not implemented (module default is 0).
        raise NotImplementedError("dropout_r > 0 is not implemented")

    *lead, d_in = x.shape
    d_in_w, d_out = w_t.shape
    assert d_in == d_in_w, "w_t must be [in_size, out_size]"
    m = int(math.prod(lead)) if lead else 1

    x2d = x.reshape(m, d_in)
    b2d = jnp.asarray(bias).reshape(1, d_out)

    # Row tile: multiple of the dtype's sublane packing (8 f32 / 16 bf16 / 32 i8).
    sub = {1: 32, 2: 16, 4: 8}.get(jnp.dtype(x.dtype).itemsize, 8)
    tm = min(tile_m, _round_up(m, sub))
    tm = max(sub, _round_up(tm, sub))

    # Lane-dense output: pad feature dim (and bias / weight columns) to a
    # multiple of 128 only if needed; demo dims are already 128-aligned.
    d_out_p = _round_up(d_out, 128)
    if d_out_p != d_out:
        w_t = jnp.pad(w_t, ((0, 0), (0, d_out_p - d_out)))
        b2d = jnp.pad(b2d, ((0, 0), (0, d_out_p - d_out)))
    tn = min(_round_up(tile_n, 128), d_out_p)

    # K tiling: full-K block if it fits the tile budget, else 128-aligned K
    # tiles.  Zero-pad K only when d_in is not a multiple of tk (zeros add 0
    # to the accumulator, so this is exact).
    if d_in <= tile_k:
        tk, d_in_p = d_in, d_in
    else:
        tk = _round_up(tile_k, 128)
        d_in_p = _round_up(d_in, tk)
        if d_in_p != d_in:
            x2d = jnp.pad(x2d, ((0, 0), (0, d_in_p - d_in)))
            w_t = jnp.pad(w_t, ((0, d_in_p - d_in), (0, 0)))

    grid = (pl.cdiv(m, tm), pl.cdiv(d_out_p, tn), d_in_p // tk)
    gm, gn, _ = grid

    kernel = functools.partial(fc_kernel, act_fun=act_fun)

    x_bytes = x2d.size * x2d.dtype.itemsize
    w_bytes = w_t.size * w_t.dtype.itemsize
    o_bytes = m * d_out_p * jnp.dtype(x.dtype).itemsize
    cost = pl.CostEstimate(
        flops=2 * m * d_in_p * d_out_p,
        transcendentals=(m * d_out_p
                         if act_fun in ("gelu", "gelu_new", "swish", "tanh")
                         else 0),
        bytes_accessed=x_bytes * gn + w_bytes * gm
        + b2d.size * b2d.dtype.itemsize + o_bytes,
    )

    out = pl.pallas_call(
        kernel,
        out_shape=jax.ShapeDtypeStruct((m, d_out_p), x.dtype),
        grid_spec=pltpu.PrefetchScalarGridSpec(
            num_scalar_prefetch=0,
            grid=grid,
            in_specs=[
                pl.BlockSpec((tm, tk), lambda i, j, k: (i, k)),   # x row/K tile
                pl.BlockSpec((tk, tn), lambda i, j, k: (k, j)),   # W K/N tile (streamed)
                pl.BlockSpec((1, tn), lambda i, j, k: (0, j)),    # bias N tile
            ],
            out_specs=pl.BlockSpec((tm, tn), lambda i, j, k: (i, j)),
            scratch_shapes=[pltpu.VMEM((tm, tn), jnp.float32)],   # f32 accumulator
        ),
        compiler_params=pltpu.CompilerParams(
            dimension_semantics=("parallel", "parallel", "arbitrary"),
            vmem_limit_bytes=_vmem_limit_bytes(),
        ),
        cost_estimate=cost,
    )(x2d, w_t, b2d)

    if d_out_p != d_out:
        out = out[:, :d_out]
    return out.reshape(*lead, d_out)


def fc_reference(x, weight, bias, act_fun="relu"):
    """Pure-JAX reference mirroring the PyTorch FC forward (torch weight layout)."""
    y = x @ weight.T + bias
    return _activation(y, act_fun)


if __name__ == "__main__":
    # FC(in_size=256, out_size=384, dropout_r=0, act_fun='relu')
    # m = 2*100 = 200 rows -> exercises the masked partial row tile (no pad/slice),
    # D_IN=256 with tk=128 -> exercises the K-accumulator, D_OUT=384 with tn=128
    # -> exercises N tiling with lane-dense stores.
    B, S, D_IN, D_OUT = 2, 100, 256, 384
    key = jax.random.PRNGKey(0)
    kx, kw, kb = jax.random.split(key, 3)

    x = jax.random.normal(kx, (B, S, D_IN), dtype=jnp.float32)

    # nn.Linear default init: uniform(-1/sqrt(fan_in), 1/sqrt(fan_in)), torch layout.
    lim = 1.0 / (D_IN ** 0.5)
    weight = jax.random.uniform(kw, (D_OUT, D_IN), jnp.float32, -lim, lim)  # [out, in]
    bias = jax.random.uniform(kb, (D_OUT,), jnp.float32, -lim, lim)

    # One-time init-style conversion to the kernel's [in, out] layout.
    w_t = prepare_linear_weight(weight)

    # f32 path (small tiles so the tiny demo still runs a real (M, N, K) grid).
    out = fc_forward(x, w_t, bias, act_fun="relu",
                     tile_m=128, tile_n=128, tile_k=128)
    out = jax.block_until_ready(out)
    ref = fc_reference(x, weight, bias, act_fun="relu")
    assert out.shape == (B, S, D_OUT)
    assert jnp.allclose(out, ref, atol=1e-4, rtol=1e-4), "f32 mismatch vs reference"

    # bf16 operand path: single-pass bf16 MXU, f32 accumulation + f32 epilogue.
    xb = x.astype(jnp.bfloat16)
    wtb = w_t.astype(jnp.bfloat16)
    out_bf = fc_forward(xb, wtb, bias, act_fun="relu",
                        tile_m=128, tile_n=128, tile_k=128)
    out_bf = jax.block_until_ready(out_bf)
    assert out_bf.shape == (B, S, D_OUT) and out_bf.dtype == jnp.bfloat16
    assert jnp.allclose(out_bf.astype(jnp.float32), ref, atol=5e-2, rtol=5e-2), \
        "bf16 mismatch vs reference"

    print("KERNEL_OK")
</pallas_src>

<mosaic_0001>
module attributes {stable_mosaic.version = 11 : i64} {
  func.func @fc_kernel(%arg0: i32, %arg1: i32, %arg2: i32, %arg3: memref<128x128xf32, #tpu.memory_space<vmem>>, %arg4: memref<128x128xf32, #tpu.memory_space<vmem>>, %arg5: memref<1x128xf32, #tpu.memory_space<vmem>>, %arg6: memref<128x128xf32, #tpu.memory_space<vmem>>, %arg7: memref<128x128xf32, #tpu.memory_space<vmem>>) attributes {dimension_semantics = [#tpu.dimension_semantics<parallel>, #tpu.dimension_semantics<parallel>, #tpu.dimension_semantics<arbitrary>], iteration_bounds = array<i64: 2, 3, 2>, scalar_prefetch = 0 : i64, scratch_operands = 1 : i64, tpu.core_type = #tpu.core_type<tc>, window_params = [{transform_indices = @transform_0, window_bounds = array<i64: 128, 128>}, {transform_indices = @transform_1, window_bounds = array<i64: 128, 128>}, {transform_indices = @transform_2, window_bounds = array<i64: 1, 128>}, {transform_indices = @transform_3, window_bounds = array<i64: 128, 128>}]} {
    %c0_i32 = arith.constant 0 : i32
    %0 = arith.cmpi eq, %arg2, %c0_i32 : i32
    %1 = arith.extui %0 : i1 to i32
    %c0_i32_0 = arith.constant 0 : i32
    %2 = arith.cmpi ne, %1, %c0_i32_0 : i32
    scf.if %2 {
      %cst_9 = arith.constant 0.000000e+00 : f32
      %12 = vector.broadcast %cst_9 : f32 to vector<128x128xf32>
      %c0_10 = arith.constant 0 : index
      %c0_11 = arith.constant 0 : index
      %13 = vector.load %arg7[%c0_10, %c0_11] : memref<128x128xf32, #tpu.memory_space<vmem>>, vector<128x128xf32>
      tpu.vector_store %arg7[%c0_10, %c0_11], %12 {strides = array<i32>} : memref<128x128xf32, #tpu.memory_space<vmem>>, vector<128x128xf32>,
    } else {
    }
    %c0 = arith.constant 0 : index
    %c0_1 = arith.constant 0 : index
    %3 = vector.load %arg7[%c0, %c0_1] : memref<128x128xf32, #tpu.memory_space<vmem>>, vector<128x128xf32>
    %c0_2 = arith.constant 0 : index
    %c0_3 = arith.constant 0 : index
    %4 = vector.load %arg3[%c0_2, %c0_3] : memref<128x128xf32, #tpu.memory_space<vmem>>, vector<128x128xf32>
    %c0_4 = arith.constant 0 : index
    %c0_5 = arith.constant 0 : index
    %5 = vector.load %arg4[%c0_4, %c0_5] : memref<128x128xf32, #tpu.memory_space<vmem>>, vector<128x128xf32>
    %cst = arith.constant dense<0.000000e+00> : vector<128x128xf32>
    %6 = tpu.matmul %4, %5, %cst {dimension_numbers = #tpu.dot_dimension_numbers<[1], [0], [0], [1], [0, 0, 1, 1], [], []>} : vector<128x128xf32>, vector<128x128xf32>, vector<128x128xf32> -> vector<128x128xf32>
    %7 = arith.addf %3, %6 : vector<128x128xf32>
    %c0_6 = arith.constant 0 : index
    %c0_7 = arith.constant 0 : index
    %8 = vector.load %arg7[%c0_6, %c0_7] : memref<128x128xf32, #tpu.memory_space<vmem>>, vector<128x128xf32>
    tpu.vector_store %arg7[%c0_6, %c0_7], %7 {strides = array<i32>} : memref<128x128xf32, #tpu.memory_space<vmem>>, vector<128x128xf32>,
    %c1_i32 = arith.constant 1 : i32
    %9 = arith.cmpi eq, %arg2, %c1_i32 : i32
    %10 = arith.extui %9 : i1 to i32
    %c0_i32_8 = arith.constant 0 : i32
    %11 = arith.cmpi ne, %10, %c0_i32_8 : i32
    scf.if %11 {
      %c0_9 = arith.constant 0 : index
      %c0_10 = arith.constant 0 : index
      %12 = vector.load %arg7[%c0_9, %c0_10] : memref<128x128xf32, #tpu.memory_space<vmem>>, vector<128x128xf32>
      %c0_11 = arith.constant 0 : index
      %c0_12 = arith.constant 0 : index
      %13 = vector.load %arg5[%c0_11, %c0_12] : memref<1x128xf32, #tpu.memory_space<vmem>>, vector<1x128xf32>
      %14 = vector.broadcast %13 : vector<1x128xf32> to vector<128x128xf32>
      %15 = arith.addf %12, %14 : vector<128x128xf32>
      %cst_13 = arith.constant 0.000000e+00 : f32
      %16 = vector.broadcast %cst_13 : f32 to vector<128x128xf32>
      %17 = arith.maximumf %15, %16 : vector<128x128xf32>
      %c0_14 = arith.constant 0 : index
      %c0_15 = arith.constant 0 : index
      %18 = vector.load %arg6[%c0_14, %c0_15] : memref<128x128xf32, #tpu.memory_space<vmem>>, vector<128x128xf32>
      tpu.vector_store %arg6[%c0_14, %c0_15], %17 {strides = array<i32>} : memref<128x128xf32, #tpu.memory_space<vmem>>, vector<128x128xf32>,
    } else {
    }
    return
  }
  func.func @transform_0(%arg0: i32, %arg1: i32, %arg2: i32) -> (i32, i32) {
    %c0_i32 = arith.constant 0 : i32
    return %arg0, %arg2 : i32, i32
  }
  func.func @transform_1(%arg0: i32, %arg1: i32, %arg2: i32) -> (i32, i32) {
    %c0_i32 = arith.constant 0 : i32
    return %arg2, %arg1 : i32, i32
  }
  func.func @transform_2(%arg0: i32, %arg1: i32, %arg2: i32) -> (i32, i32) {
    %c0_i32 = arith.constant 0 : i32
    %c0_i32_0 = arith.constant 0 : i32
    return %c0_i32, %arg1 : i32, i32
  }
  func.func @transform_3(%arg0: i32, %arg1: i32, %arg2: i32) -> (i32, i32) {
    %c0_i32 = arith.constant 0 : i32
    return %arg0, %arg1 : i32, i32
  }
}

</mosaic_0001>

<llo_original>
// kernel: tpu_custom_call.1
$region0: #{tpu_custom_call.1}
  #allocation0 [shape = 'u32[]', space=smem, size = 0x4, offset = 0x4, fixed_abs, tag = 'smem constant byte address 0x4 - core index']
  #allocation1 [shape = 'u32[144,128]{1,0:T(1,128)}', space=vmem, size = 0x12000, scoped, tag = 'internal scratch']
  #allocation2 [shape = 'f32[128,128]{1,0:T(8,128)}', space=vmem, size = 0x10000, scoped, tag = 'scratch operand']
  %s0 = inlined_call_operand.hbm [shape: f32[200,256], index: 0, kind: input, shape index: {}]
  %s1 = inlined_call_operand.hbm [shape: f32[256,384], index: 1, kind: input, shape index: {}]
  %s2 = inlined_call_operand.hbm [shape: f32[1,384], index: 2, kind: input, shape index: {}]
  %s3 = inlined_call_operand.hbm [shape: f32[200,384], index: 3, kind: output, shape index: {}]
  %s4 = sld [smem:[#allocation0]]
  $region65: #{tpu_custom_call.1} parent=0
    _
  %s6 = ssub.s32 1, %s4
  %s7 = scalar_select 0, %s6, %s4
  $region1: #{tpu_custom_call.1} parent=0
    #allocation3 [shape = 'u8[131072]{0}', space=vmem, size = 0x20000, scoped, tag = 'input window, operand 0']
    #allocation4 [shape = 's32[2]{0}', space=sflag, size = 0x8, scoped, tag = 'scoped memory for tpu_custom_call.1']
    #allocation5 [shape = 's32[2]{0}', space=sflag, size = 0x8, scoped, tag = 'scoped memory for tpu_custom_call.1']
    #allocation6 [shape = 'u8[131072]{0}', space=vmem, size = 0x20000, scoped, tag = 'input window, operand 1']
    #allocation7 [shape = 's32[2]{0}', space=sflag, size = 0x8, scoped, tag = 'scoped memory for tpu_custom_call.1']
    #allocation8 [shape = 'u8[1024]{0}', space=vmem, size = 0x400, scoped, tag = 'input window, operand 2']
    #allocation9 [shape = 'u8[131072]{0}', space=vmem, size = 0x20000, scoped, tag = 'output window, operand 0']
    %8 = vsyncpa [#allocation4], 0
    %s9 = scalar_lea.sflag [#allocation4], 1
    %10 = vsyncpa %s9, 0
    %11 = vsyncpa [#allocation7], 0
    %s12 = scalar_lea.sflag [#allocation7], 1
    %13 = vsyncpa %s12, 0
    %14 = vsyncpa [#allocation5], 0
    %s15 = scalar_lea.sflag [#allocation5], 1
    %16 = vsyncpa %s15, 0
    loop: start=0, step=1, limit=14
    $region2: #{tpu_custom_call.1} parent=1 // loop_pre_header
      _
    $region3: #{tpu_custom_call.1} parent=1 // loop_header
      %s18 = sphi 0, %s22
      %p19 = scmp.ge.s32.totalorder %s18, 14
      %s25 = sphi 0, %s44
      %s26 = sphi 0, %s40
      %s27 = sphi 0, %s36
      %s28 = sphi 0, %s25
      %s29 = sphi 0, %s26
      %s30 = sphi 0, %s27
      %s31 = sphi 0, %s28
      %s32 = sphi 0, %s29
      %s33 = sphi 0, %s30
      %s49 = sphi 0, %s51
      %s52 = sphi 0, %s49
      %s53 = sphi 0, %s52
      %s69 = sphi 0, %s53
      %s77 = sphi 0, %s79
      %s80 = sphi 0, %s77
      %s81 = sphi 0, %s80
      %s97 = sphi 0, %s81
      %s103 = sphi 0, %s105
      %s106 = sphi 0, %s103
      %s107 = sphi 0, %s106
      %s123 = sphi 0, %s107
      %s131 = sphi 0, %s133
      %s134 = sphi 0, %s131
      %s135 = sphi 0, %s134
      %s151 = sphi 0, %s135
    $region4: #{tpu_custom_call.1} parent=1 // loop_header_branch
      %21 = sbr.rel (%p19) target = $region8
    $region5: #{tpu_custom_call.1} parent=1 // loop_body
      %s23 = ssub.s32 %s18, 1
      %s24 = ssub.s32 %s18, 2
      %s34 = sadd.s32 1, %s27
      %p35 = scmp.ge.s32.totalorder %s34, 2
      %s36 = scalar_select %p35, 0, %s34
      %s37 = sadd.s32 1, %s26
      %s38 = scalar_select %p35, %s37, %s26
      %p39 = scmp.ge.s32.totalorder %s38, 3
      %s40 = scalar_select %p39, 0, %s38
      %s41 = sadd.s32 1, %s25
      %s42 = scalar_select %p39, %s41, %s25
      %p43 = scmp.ge.s32.totalorder %s42, 2
      %s44 = scalar_select %p43, 0, %s42
      %s45 = ssub.s32 %s25, %s44
      %s46 = ssub.s32 %s27, %s36
      %s47 = sor.u32 %s45, %s46
      %p48 = scmp.eq.s32.totalorder %s47, 0
      %s50 = sadd.s32 %s49, 1
      %s51 = scalar_select %p48, %s49, %s50
      %p54 = pneg %p48
      %p55 = scmp.eq.s32.totalorder %s18, 11
      %p56 = por %p54, %p55
      %p57 = scmp.ne.s32.totalorder %s49, %s52
      %p58 = scmp.eq.s32.totalorder %s18, 0
      %p59 = por %p57, %p58
      %p60 = scmp.ne.s32.totalorder %s49, %s52
      %p61 = scmp.eq.s32.totalorder %s23, 11
      %p62 = por %p60, %p61
      %p63 = scmp.ne.s32.totalorder %s52, %s53
      %p64 = scmp.eq.s32.totalorder %s23, 0
      %p65 = por %p63, %p64
      %p66 = scmp.ne.s32.totalorder %s52, %s53
      %p67 = scmp.eq.s32.totalorder %s24, 11
      %p68 = por %p66, %p67
      %p70 = scmp.ne.s32.totalorder %s53, %s69
      %p71 = scmp.eq.s32.totalorder %s24, 0
      %p72 = por %p70, %p71
      %s73 = ssub.s32 %s27, %s36
      %s74 = ssub.s32 %s26, %s40
      %s75 = sor.u32 %s73, %s74
      %p76 = scmp.eq.s32.totalorder %s75, 0
      %s78 = sadd.s32 %s77, 1
      %s79 = scalar_select %p76, %s77, %s78
      %p82 = pneg %p76
      %p83 = scmp.eq.s32.totalorder %s18, 11
      %p84 = por %p82, %p83
      %p85 = scmp.ne.s32.totalorder %s77, %s80
      %p86 = scmp.eq.s32.totalorder %s18, 0
      %p87 = por %p85, %p86
      %p88 = scmp.ne.s32.totalorder %s77, %s80
      %p89 = scmp.eq.s32.totalorder %s23, 11
      %p90 = por %p88, %p89
      %p91 = scmp.ne.s32.totalorder %s80, %s81
      %p92 = scmp.eq.s32.totalorder %s23, 0
      %p93 = por %p91, %p92
      %p94 = scmp.ne.s32.totalorder %s80, %s81
      %p95 = scmp.eq.s32.totalorder %s24, 11
      %p96 = por %p94, %p95
      %p98 = scmp.ne.s32.totalorder %s81, %s97
      %p99 = scmp.eq.s32.totalorder %s24, 0
      %p100 = por %p98, %p99
      %s101 = ssub.s32 %s26, %s40
      %p102 = scmp.eq.s32.totalorder %s101, 0
      %s104 = sadd.s32 %s103, 1
      %s105 = scalar_select %p102, %s103, %s104
      %p108 = pneg %p102
      %p109 = scmp.eq.s32.totalorder %s18, 11
      %p110 = por %p108, %p109
      %p111 = scmp.ne.s32.totalorder %s103, %s106
      %p112 = scmp.eq.s32.totalorder %s18, 0
      %p113 = por %p111, %p112
      %p114 = scmp.ne.s32.totalorder %s103, %s106
      %p115 = scmp.eq.s32.totalorder %s23, 11
      %p116 = por %p114, %p115
      %p117 = scmp.ne.s32.totalorder %s106, %s107
      %p118 = scmp.eq.s32.totalorder %s23, 0
      %p119 = por %p117, %p118
      %p120 = scmp.ne.s32.totalorder %s106, %s107
      %p121 = scmp.eq.s32.totalorder %s24, 11
      %p122 = por %p120, %p121
      %p124 = scmp.ne.s32.totalorder %s107, %s123
      %p125 = scmp.eq.s32.totalorder %s24, 0
      %p126 = por %p124, %p125
      %s127 = ssub.s32 %s25, %s44
      %s128 = ssub.s32 %s26, %s40
      %s129 = sor.u32 %s127, %s128
      %p130 = scmp.eq.s32.totalorder %s129, 0
      %s132 = sadd.s32 %s131, 1
      %s133 = scalar_select %p130, %s131, %s132
      %p136 = pneg %p130
      %p137 = scmp.eq.s32.totalorder %s18, 11
      %p138 = por %p136, %p137
      %p139 = scmp.ne.s32.totalorder %s131, %s134
      %p140 = scmp.eq.s32.totalorder %s18, 0
      %p141 = por %p139, %p140
      %p142 = scmp.ne.s32.totalorder %s131, %s134
      %p143 = scmp.eq.s32.totalorder %s23, 11
      %p144 = por %p142, %p143
      %p145 = scmp.ne.s32.totalorder %s134, %s135
      %p146 = scmp.eq.s32.totalorder %s23, 0
      %p147 = por %p145, %p146
      %p148 = scmp.ne.s32.totalorder %s134, %s135
      %p149 = scmp.eq.s32.totalorder %s24, 11
      %p150 = por %p148, %p149
      %p152 = scmp.ne.s32.totalorder %s135, %s151
      %p153 = scmp.eq.s32.totalorder %s24, 0
      %p154 = por %p152, %p153
      %p155 = scmp.le.s32.totalorder 1, %s18
      %p156 = scmp.lt.s32.totalorder %s18, 13
      %p157 = pnand %p155, %p156
      %p158 = pneg %p157
      // Predicated region
      $region9: #{tpu_custom_call.1} parent=5 // pred_check
        _
      $region10: #{tpu_custom_call.1} parent=5 // pred_check_branch
        %160 = sbr.rel (%p157) target = $region12
      $region11: #{tpu_custom_call.1} parent=5 // pred_region
        %s161 = ssub.s32 %s18, 1
      $region12: #{tpu_custom_call.1} parent=5 // pred_fallthru
        _
      %p162 = scmp.lt.s32.totalorder %s18, 12
      // Predicated region
      $region13: #{tpu_custom_call.1} parent=5 // pred_check
        %p163 = pneg %p162
      $region14: #{tpu_custom_call.1} parent=5 // pred_check_branch
        %165 = sbr.rel (%p163) target = $region16
      $region15: #{tpu_custom_call.1} parent=5 // pred_region
        // Predicated region
        $region17: #{tpu_custom_call.1} parent=15 // pred_check
          %p166 = pneg %p59
        $region18: #{tpu_custom_call.1} parent=15 // pred_check_branch
          %168 = sbr.rel (%p166) target = $region20
        $region19: #{tpu_custom_call.1} parent=15 // pred_region
          %s169 = sand.u32 %s49, 1
          %s170 = scalar_lea.sflag [#allocation4], %s169
          %s171 = sand.u32 %s49, 1
          %s172 = smul.addr %s171, 128
          %s173 = scalar_lea.vmem [#allocation3], %s172
          %s174 = smul.u32 16, %s25
          %s175 = ssub.s32 25, %s174
          %p176 = scmp.lt.s32.totalorder %s175, 16
          %s177 = scalar_select %p176, %s175, 16
          %s178 = smul.u32 128, %s177
          %s180 = ssub.s32 2048, %s178
          %181 = vsyncadd %s170, %s180
          %p182 = scmp.ne.s32.totalorder 0, %s178
          %s183 = smul.addr %s174, 2
          %s184 = sadd.s32 %s27, %s183
          %s185 = smul.addr %s184, 128
          %s186 = scalar_lea.hbm %s0, %s185
          %s187 = smul.u32 8, %s177
          %s188 = sshll.u32 %s173, 4
          %s189 = int_to_ptr.vmem [resolvable:$true] %s188
          %s190 = sshll.u32 %s187, 4
          %194 = dma.hbm_to_vmem [thread:$0]  (%p182), %s186, %s190, %s189, %s170, 256, 128, 8
        $region20: #{tpu_custom_call.1} parent=15 // pred_fallthru
          _
        // Predicated region
        $region21: #{tpu_custom_call.1} parent=15 // pred_check
          %p195 = pneg %p87
        $region22: #{tpu_custom_call.1} parent=15 // pred_check_branch
          %197 = sbr.rel (%p195) target = $region24
        $region23: #{tpu_custom_call.1} parent=15 // pred_region
          %s198 = sand.u32 %s18, 1
          %s199 = scalar_lea.sflag [#allocation7], %s198
          %s200 = sand.u32 %s77, 1
          %s201 = smul.addr %s200, 128
          %s202 = scalar_lea.vmem [#allocation6], %s201
          %s203 = smul.u32 16, %s27
          %s205 = ssub.s32 2048, 2048
          %206 = vsyncadd %s199, %s205
          %s207 = smul.addr %s203, 3
          %s208 = sadd.s32 %s26, %s207
          %s209 = smul.addr %s208, 128
          %s210 = scalar_lea.hbm %s1, %s209
          %s211 = sshll.u32 %s202, 4
          %s212 = int_to_ptr.vmem [resolvable:$true] %s211
          %217 = dma.hbm_to_vmem [thread:$0]  %s210, 2048, %s212, %s199, 384, 128, 8
        $region24: #{tpu_custom_call.1} parent=15 // pred_fallthru
          _
        // Predicated region
        $region25: #{tpu_custom_call.1} parent=15 // pred_check
          %p218 = pneg %p113
        $region26: #{tpu_custom_call.1} parent=15 // pred_check_branch
          %220 = sbr.rel (%p218) target = $region28
        $region27: #{tpu_custom_call.1} parent=15 // pred_region
          %s221 = sand.u32 %s18, 1
          %s222 = scalar_lea.sflag [#allocation7], %s221
          %s223 = sand.u32 %s103, 1
          %s224 = scalar_lea.vmem [#allocation8], %s223
          %s226 = ssub.s32 16, 16
          %227 = vsyncadd %s222, %s226
          %s228 = smul.addr %s26, 16
          %s229 = scalar_lea.hbm %s2, %s228
          %s231 = sshll.u32 %s224, 4
          %s232 = int_to_ptr.vmem [resolvable:$true] %s231
          %234 = dma.hbm_to_vmem [thread:$0]  %s229, 16, %s232, %s222
        $region28: #{tpu_custom_call.1} parent=15 // pred_fallthru
          _
      $region16: #{tpu_custom_call.1} parent=5 // pred_fallthru
        _
      %p235 = scmp.le.s32.totalorder 1, %s18
      %p236 = scmp.lt.s32.totalorder %s18, 13
      %p237 = pnand %p235, %p236
      %p238 = pneg %p237
      // Predicated region
      $region29: #{tpu_custom_call.1} parent=5 // pred_check
        _
      $region30: #{tpu_custom_call.1} parent=5 // pred_check_branch
        %240 = sbr.rel (%p237) target = $region32
      $region31: #{tpu_custom_call.1} parent=5 // pred_region
        %s241 = ssub.s32 %s18, 1
        %s242 = sand.u32 %s52, 1
        %s243 = scalar_lea.sflag [#allocation4], %s242
        %s244 = sand.u32 %s52, 1
        %s245 = smul.addr %s244, 128
        %s246 = scalar_lea.vmem [#allocation3], %s245
        // Predicated region
        $region33: #{tpu_custom_call.1} parent=31 // pred_check
          %p247 = pneg %p65
        $region34: #{tpu_custom_call.1} parent=31 // pred_check_branch
          %249 = sbr.rel (%p247) target = $region36
        $region35: #{tpu_custom_call.1} parent=31 // pred_region
          %250 = dma.done %s243, 2048
        $region36: #{tpu_custom_call.1} parent=31 // pred_fallthru
          _
        %s251 = sand.u32 %s23, 1
        %s252 = scalar_lea.sflag [#allocation7], %s251
        %s253 = sand.u32 %s80, 1
        %s254 = smul.addr %s253, 128
        %s255 = scalar_lea.vmem [#allocation6], %s254
        // Predicated region
        $region37: #{tpu_custom_call.1} parent=31 // pred_check
          %p256 = pneg %p93
        $region38: #{tpu_custom_call.1} parent=31 // pred_check_branch
          %258 = sbr.rel (%p256) target = $region40
        $region39: #{tpu_custom_call.1} parent=31 // pred_region
          %259 = dma.done %s252, 2048
        $region40: #{tpu_custom_call.1} parent=31 // pred_fallthru
          _
        %s260 = sand.u32 %s23, 1
        %s261 = scalar_lea.sflag [#allocation7], %s260
        %s262 = sand.u32 %s106, 1
        %s263 = scalar_lea.vmem [#allocation8], %s262
        // Predicated region
        $region41: #{tpu_custom_call.1} parent=31 // pred_check
          %p264 = pneg %p119
        $region42: #{tpu_custom_call.1} parent=31 // pred_check_branch
          %266 = sbr.rel (%p264) target = $region44
        $region43: #{tpu_custom_call.1} parent=31 // pred_region
          %267 = dma.done %s261, 16
        $region44: #{tpu_custom_call.1} parent=31 // pred_fallthru
          _
        %s268 = sand.u32 %s52, 1
        %s269 = scalar_lea.sflag [#allocation4], %s268
        %s270 = sand.u32 %s52, 1
        %s271 = smul.addr %s270, 128
        %s272 = scalar_lea.vmem [#allocation3], %s271
        %p273 = pneg %p65
        %p274 = pneg %p62
        %s275 = sand.u32 %s23, 1
        %s276 = scalar_lea.sflag [#allocation7], %s275
        %s277 = sand.u32 %s80, 1
        %s278 = smul.addr %s277, 128
        %s279 = scalar_lea.vmem [#allocation6], %s278
        %p280 = pneg %p93
        %p281 = pneg %p90
        %s282 = sand.u32 %s23, 1
        %s283 = scalar_lea.sflag [#allocation7], %s282
        %s284 = sand.u32 %s106, 1
        %s285 = scalar_lea.vmem [#allocation8], %s284
        %p286 = pneg %p119
        %p287 = pneg %p116
        %p288 = pneg %p147
        %p289 = pneg %p144
        %s290 = sand.u32 %s134, 1
        %s291 = scalar_lea.sflag [#allocation5], %s290
        %s292 = sand.u32 %s134, 1
        %s293 = smul.addr %s292, 128
        %s294 = scalar_lea.vmem [#allocation9], %s293
        %s295 = smul.u32 16, %s28
        %s296 = ssub.s32 25, %s295
        %p297 = scmp.lt.s32.totalorder %s296, 16
        %s298 = scalar_select %p297, %s296, 16
        %s299 = smul.u32 128, %s298
        %s300 = smul.u32 16, %s30
        %s301 = smul.u32 16, %s28
        %s302 = ssub.s32 25, %s301
        %p303 = scmp.lt.s32.totalorder %s302, 16
        %s304 = scalar_select %p303, %s302, 16
        %s305 = smul.u32 128, %s304
        %p306 = scmp.eq.s32.totalorder %s30, 0
        // Predicated region
        $region45: #{tpu_custom_call.1} parent=31 // pred_check
          %p307 = pneg %p306
        $region46: #{tpu_custom_call.1} parent=31 // pred_check_branch
          %309 = sbr.rel (%p307) target = $region48
        $region47: #{tpu_custom_call.1} parent=31 // pred_region
          %310 = vst [vmem:[#allocation2] sm:$0xff] 0.0
          %311 = vst [vmem:[#allocation2 + $0x8] sm:$0xff] 0.0
          %312 = vst [vmem:[#allocation2 + $0x10] sm:$0xff] 0.0
          %313 = vst [vmem:[#allocation2 + $0x18] sm:$0xff] 0.0
          %314 = vst [vmem:[#allocation2 + $0x20] sm:$0xff] 0.0
          %315 = vst [vmem:[#allocation2 + $0x28] sm:$0xff] 0.0
          %316 = vst [vmem:[#allocation2 + $0x30] sm:$0xff] 0.0
          %317 = vst [vmem:[#allocation2 + $0x38] sm:$0xff] 0.0
          %318 = vst [vmem:[#allocation2 + $0x40] sm:$0xff] 0.0
          %319 = vst [vmem:[#allocation2 + $0x48] sm:$0xff] 0.0
          %320 = vst [vmem:[#allocation2 + $0x50] sm:$0xff] 0.0
          %321 = vst [vmem:[#allocation2 + $0x58] sm:$0xff] 0.0
          %322 = vst [vmem:[#allocation2 + $0x60] sm:$0xff] 0.0
          %323 = vst [vmem:[#allocation2 + $0x68] sm:$0xff] 0.0
          %324 = vst [vmem:[#allocation2 + $0x70] sm:$0xff] 0.0
          %325 = vst [vmem:[#allocation2 + $0x78] sm:$0xff] 0.0
        $region48: #{tpu_custom_call.1} parent=31 // pred_fallthru
          _
        %v326 = vld [vmem:[#allocation2] sm:$0xff]
        %v327 = vld [vmem:[#allocation2 + $0x8] sm:$0xff]
        %v328 = vld [vmem:[#allocation2 + $0x10] sm:$0xff]
        %v329 = vld [vmem:[#allocation2 + $0x18] sm:$0xff]
        %v330 = vld [vmem:[#allocation2 + $0x20] sm:$0xff]
        %v331 = vld [vmem:[#allocation2 + $0x28] sm:$0xff]
        %v332 = vld [vmem:[#allocation2 + $0x30] sm:$0xff]
        %v333 = vld [vmem:[#allocation2 + $0x38] sm:$0xff]
        %v334 = vld [vmem:[#allocation2 + $0x40] sm:$0xff]
        %v335 = vld [vmem:[#allocation2 + $0x48] sm:$0xff]
        %v336 = vld [vmem:[#allocation2 + $0x50] sm:$0xff]
        %v337 = vld [vmem:[#allocation2 + $0x58] sm:$0xff]
        %v338 = vld [vmem:[#allocation2 + $0x60] sm:$0xff]
        %v339 = vld [vmem:[#allocation2 + $0x68] sm:$0xff]
        %v340 = vld [vmem:[#allocation2 + $0x70] sm:$0xff]
        %v341 = vld [vmem:[#allocation2 + $0x78] sm:$0xff]
        %v342 = vld [vmem:[%s246] sm:$0xff]
        %v343 = vld [vmem:[%s246 + $0x8] sm:$0xff]
        %v344 = vld [vmem:[%s246 + $0x10] sm:$0xff]
        %v345 = vld [vmem:[%s246 + $0x18] sm:$0xff]
        %v346 = vld [vmem:[%s246 + $0x20] sm:$0xff]
        %v347 = vld [vmem:[%s246 + $0x28] sm:$0xff]
        %v348 = vld [vmem:[%s246 + $0x30] sm:$0xff]
        %v349 = vld [vmem:[%s246 + $0x38] sm:$0xff]
        %v350 = vld [vmem:[%s246 + $0x40] sm:$0xff]
        %v351 = vld [vmem:[%s246 + $0x48] sm:$0xff]
        %v352 = vld [vmem:[%s246 + $0x50] sm:$0xff]
        %v353 = vld [vmem:[%s246 + $0x58] sm:$0xff]
        %v354 = vld [vmem:[%s246 + $0x60] sm:$0xff]
        %v355 = vld [vmem:[%s246 + $0x68] sm:$0xff]
        %v356 = vld [vmem:[%s246 + $0x70] sm:$0xff]
        %v357 = vld [vmem:[%s246 + $0x78] sm:$0xff]
        %v358 = vld [vmem:[%s255] sm:$0xff]
        %v359 = vld [vmem:[%s255 + $0x8] sm:$0xff]
        %v360 = vld [vmem:[%s255 + $0x10] sm:$0xff]
        %v361 = vld [vmem:[%s255 + $0x18] sm:$0xff]
        %v362 = vld [vmem:[%s255 + $0x20] sm:$0xff]
        %v363 = vld [vmem:[%s255 + $0x28] sm:$0xff]
        %v364 = vld [vmem:[%s255 + $0x30] sm:$0xff]
        %v365 = vld [vmem:[%s255 + $0x38] sm:$0xff]
        %v366 = vld [vmem:[%s255 + $0x40] sm:$0xff]
        %v367 = vld [vmem:[%s255 + $0x48] sm:$0xff]
        %v368 = vld [vmem:[%s255 + $0x50] sm:$0xff]
        %v369 = vld [vmem:[%s255 + $0x58] sm:$0xff]
        %v370 = vld [vmem:[%s255 + $0x60] sm:$0xff]
        %v371 = vld [vmem:[%s255 + $0x68] sm:$0xff]
        %v372 = vld [vmem:[%s255 + $0x70] sm:$0xff]
        %v373 = vld [vmem:[%s255 + $0x78] sm:$0xff]
        %374 = vmatprep.subr.mxu0 0.0
        %375 = vmatpush1.msra.mxu0 %v358
        %376 = vmatprep.subr.mxu0 0.0
        %377 = vmatpush1.msra.mxu0 %v359
        %378 = vmatprep.subr.mxu0 0.0
        %379 = vmatpush1.msra.mxu0 %v360
        %380 = vmatprep.subr.mxu0 0.0
        %381 = vmatpush1.msra.mxu0 %v361
        %382 = vmatprep.subr.mxu0 0.0
        %383 = vmatpush1.msra.mxu0 %v362
        %384 = vmatprep.subr.mxu0 0.0
        %385 = vmatpush1.msra.mxu0 %v363
        %386 = vmatprep.subr.mxu0 0.0
        %387 = vmatpush1.msra.mxu0 %v364
        %388 = vmatprep.subr.mxu0 0.0
        %389 = vmatpush1.msra.mxu0 %v365
        %390 = vmatprep.subr.mxu0 0.0
        %391 = vmatpush1.msra.mxu0 %v366
        %392 = vmatprep.subr.mxu0 0.0
        %393 = vmatpush1.msra.mxu0 %v367
        %394 = vmatprep.subr.mxu0 0.0
        %395 = vmatpush1.msra.mxu0 %v368
        %396 = vmatprep.subr.mxu0 0.0
        %397 = vmatpush1.msra.mxu0 %v369
        %398 = vmatprep.subr.mxu0 0.0
        %399 = vmatpush1.msra.mxu0 %v370
        %400 = vmatprep.subr.mxu0 0.0
        %401 = vmatpush1.msra.mxu0 %v371
        %402 = vmatprep.subr.mxu0 0.0
        %403 = vmatpush1.msra.mxu0 %v372
        %404 = vmatprep.subr.mxu0 0.0
        %405 = vmatpush1.msra.mxu0 %v373
        %406 = vmatprep.subr.mxu0 0.0
        %407 = vmatpush1.msra.mxu0 0.0
        %408 = vmatprep.subr.mxu0 0.0
        %409 = vmatpush1.msra.mxu0 0.0
        %410 = vmatprep.subr.mxu0 0.0
        %411 = vmatpush1.msra.mxu0 0.0
        %412 = vmatprep.subr.mxu0 0.0
        %413 = vmatpush1.msra.mxu0 0.0
        %414 = vmatprep.subr.mxu0 0.0
        %415 = vmatpush1.msra.mxu0 0.0
        %416 = vmatprep.subr.mxu0 0.0
        %417 = vmatpush1.msra.mxu0 0.0
        %418 = vmatprep.subr.mxu0 0.0
        %419 = vmatpush1.msra.mxu0 0.0
        %420 = vmatprep.subr.mxu0 0.0
        %421 = vmatpush1.msra.mxu0 0.0
        %422 = vmatprep.subr.mxu0 0.0
        %423 = vmatpush1.msra.mxu0 0.0
        %424 = vmatprep.subr.mxu0 0.0
        %425 = vmatpush1.msra.mxu0 0.0
        %426 = vmatprep.subr.mxu0 0.0
        %427 = vmatpush1.msra.mxu0 0.0
        %428 = vmatprep.subr.mxu0 0.0
        %429 = vmatpush1.msra.mxu0 0.0
        %430 = vmatprep.subr.mxu0 0.0
        %431 = vmatpush1.msra.mxu0 0.0
        %432 = vmatprep.subr.mxu0 0.0
        %433 = vmatpush1.msra.mxu0 0.0
        %434 = vmatprep.subr.mxu0 0.0
        %435 = vmatpush1.msra.mxu0 0.0
        %436 = vmatprep.subr.mxu0 0.0
        %437 = vmatpush1.msra.mxu0 0.0
        %438 = vmatprep.mubr.f32.mxu0 0.0
        %439 = vmatmul.mubr.f32.gmra.mrb[0].mxu0 %v342
        %v440 = vpop.f32.mrb[0].mxu0
        %v441 = vadd.f32 0.0, %v440
        %v442 = vpop.f32.mrb[0].mxu0
        %443 = vmatprep.mubr.f32.mxu0 0.0
        %444 = vmatmul.mubr.f32.gmra.mrb[0].mxu0 %v343
        %v445 = vpop.f32.mrb[0].mxu0
        %v446 = vadd.f32 0.0, %v445
        %v447 = vpop.f32.mrb[0].mxu0
        %448 = vmatprep.mubr.f32.mxu0 0.0
        %449 = vmatmul.mubr.f32.gmra.mrb[0].mxu0 %v344
        %v450 = vpop.f32.mrb[0].mxu0
        %v451 = vadd.f32 0.0, %v450
        %v452 = vpop.f32.mrb[0].mxu0
        %453 = vmatprep.mubr.f32.mxu0 0.0
        %454 = vmatmul.mubr.f32.gmra.mrb[0].mxu0 %v345
        %v455 = vpop.f32.mrb[0].mxu0
        %v456 = vadd.f32 0.0, %v455
        %v457 = vpop.f32.mrb[0].mxu0
        %458 = vmatprep.mubr.f32.mxu0 0.0
        %459 = vmatmul.mubr.f32.gmra.mrb[0].mxu0 %v346
        %v460 = vpop.f32.mrb[0].mxu0
        %v461 = vadd.f32 0.0, %v460
        %v462 = vpop.f32.mrb[0].mxu0
        %463 = vmatprep.mubr.f32.mxu0 0.0
        %464 = vmatmul.mubr.f32.gmra.mrb[0].mxu0 %v347
        %v465 = vpop.f32.mrb[0].mxu0
        %v466 = vadd.f32 0.0, %v465
        %v467 = vpop.f32.mrb[0].mxu0
        %468 = vmatprep.mubr.f32.mxu0 0.0
        %469 = vmatmul.mubr.f32.gmra.mrb[0].mxu0 %v348
        %v470 = vpop.f32.mrb[0].mxu0
        %v471 = vadd.f32 0.0, %v470
        %v472 = vpop.f32.mrb[0].mxu0
        %473 = vmatprep.mubr.f32.mxu0 0.0
        %474 = vmatmul.mubr.f32.gmra.mrb[0].mxu0 %v349
        %v475 = vpop.f32.mrb[0].mxu0
        %v476 = vadd.f32 0.0, %v475
        %v477 = vpop.f32.mrb[0].mxu0
        %478 = vmatprep.mubr.f32.mxu0 0.0
        %479 = vmatmul.mubr.f32.gmra.mrb[0].mxu0 %v350
        %v480 = vpop.f32.mrb[0].mxu0
        %v481 = vadd.f32 0.0, %v480
        %v482 = vpop.f32.mrb[0].mxu0
        %483 = vmatprep.mubr.f32.mxu0 0.0
        %484 = vmatmul.mubr.f32.gmra.mrb[0].mxu0 %v351
        %v485 = vpop.f32.mrb[0].mxu0
        %v486 = vadd.f32 0.0, %v485
        %v487 = vpop.f32.mrb[0].mxu0
        %488 = vmatprep.mubr.f32.mxu0 0.0
        %489 = vmatmul.mubr.f32.gmra.mrb[0].mxu0 %v352
        %v490 = vpop.f32.mrb[0].mxu0
        %v491 = vadd.f32 0.0, %v490
        %v492 = vpop.f32.mrb[0].mxu0
        %493 = vmatprep.mubr.f32.mxu0 0.0
        %494 = vmatmul.mubr.f32.gmra.mrb[0].mxu0 %v353
        %v495 = vpop.f32.mrb[0].mxu0
        %v496 = vadd.f32 0.0, %v495
        %v497 = vpop.f32.mrb[0].mxu0
        %498 = vmatprep.mubr.f32.mxu0 0.0
        %499 = vmatmul.mubr.f32.gmra.mrb[0].mxu0 %v354
        %v500 = vpop.f32.mrb[0].mxu0
        %v501 = vadd.f32 0.0, %v500
        %v502 = vpop.f32.mrb[0].mxu0
        %503 = vmatprep.mubr.f32.mxu0 0.0
        %504 = vmatmul.mubr.f32.gmra.mrb[0].mxu0 %v355
        %v505 = vpop.f32.mrb[0].mxu0
        %v506 = vadd.f32 0.0, %v505
        %v507 = vpop.f32.mrb[0].mxu0
        %508 = vmatprep.mubr.f32.mxu0 0.0
        %509 = vmatmul.mubr.f32.gmra.mrb[0].mxu0 %v356
        %v510 = vpop.f32.mrb[0].mxu0
        %v511 = vadd.f32 0.0, %v510
        %v512 = vpop.f32.mrb[0].mxu0
        %513 = vmatprep.mubr.f32.mxu0 0.0
        %514 = vmatmul.mubr.f32.gmra.mrb[0].mxu0 %v357
        %v515 = vpop.f32.mrb[0].mxu0
        %v516 = vadd.f32 0.0, %v515
        %v517 = vpop.f32.mrb[0].mxu0
        %518 = vdwg.mxu0
        %v519 = vadd.f32 %v326, %v441
        %v520 = vadd.f32 %v327, %v446
        %v521 = vadd.f32 %v328, %v451
        %v522 = vadd.f32 %v329, %v456
        %v523 = vadd.f32 %v330, %v461
        %v524 = vadd.f32 %v331, %v466
        %v525 = vadd.f32 %v332, %v471
        %v526 = vadd.f32 %v333, %v476
        %v527 = vadd.f32 %v334, %v481
        %v528 = vadd.f32 %v335, %v486
        %v529 = vadd.f32 %v336, %v491
        %v530 = vadd.f32 %v337, %v496
        %v531 = vadd.f32 %v338, %v501
        %v532 = vadd.f32 %v339, %v506
        %v533 = vadd.f32 %v340, %v511
        %v534 = vadd.f32 %v341, %v516
        %535 = vst [vmem:[#allocation2] sm:$0xff] %v519
        %536 = vst [vmem:[#allocation2 + $0x8] sm:$0xff] %v520
        %537 = vst [vmem:[#allocation2 + $0x10] sm:$0xff] %v521
        %538 = vst [vmem:[#allocation2 + $0x18] sm:$0xff] %v522
        %539 = vst [vmem:[#allocation2 + $0x20] sm:$0xff] %v523
        %540 = vst [vmem:[#allocation2 + $0x28] sm:$0xff] %v524
        %541 = vst [vmem:[#allocation2 + $0x30] sm:$0xff] %v525
        %542 = vst [vmem:[#allocation2 + $0x38] sm:$0xff] %v526
        %543 = vst [vmem:[#allocation2 + $0x40] sm:$0xff] %v527
        %544 = vst [vmem:[#allocation2 + $0x48] sm:$0xff] %v528
        %545 = vst [vmem:[#allocation2 + $0x50] sm:$0xff] %v529
        %546 = vst [vmem:[#allocation2 + $0x58] sm:$0xff] %v530
        %547 = vst [vmem:[#allocation2 + $0x60] sm:$0xff] %v531
        %548 = vst [vmem:[#allocation2 + $0x68] sm:$0xff] %v532
        %549 = vst [vmem:[#allocation2 + $0x70] sm:$0xff] %v533
        %550 = vst [vmem:[#allocation2 + $0x78] sm:$0xff] %v534
        %p551 = scmp.eq.s32.totalorder %s30, 1
        // Predicated region
        $region49: #{tpu_custom_call.1} parent=31 // pred_check
          %p552 = pneg %p551
        $region50: #{tpu_custom_call.1} parent=31 // pred_check_branch
          %554 = sbr.rel (%p552) target = $region52
        $region51: #{tpu_custom_call.1} parent=31 // pred_region
          %v555 = vld [vmem:[#allocation2] sm:$0xff]
          %v556 = vld [vmem:[#allocation2 + $0x8] sm:$0xff]
          %v557 = vld [vmem:[#allocation2 + $0x10] sm:$0xff]
          %v558 = vld [vmem:[#allocation2 + $0x18] sm:$0xff]
          %v559 = vld [vmem:[#allocation2 + $0x20] sm:$0xff]
          %v560 = vld [vmem:[#allocation2 + $0x28] sm:$0xff]
          %v561 = vld [vmem:[#allocation2 + $0x30] sm:$0xff]
          %v562 = vld [vmem:[#allocation2 + $0x38] sm:$0xff]
          %v563 = vld [vmem:[#allocation2 + $0x40] sm:$0xff]
          %v564 = vld [vmem:[#allocation2 + $0x48] sm:$0xff]
          %v565 = vld [vmem:[#allocation2 + $0x50] sm:$0xff]
          %v566 = vld [vmem:[#allocation2 + $0x58] sm:$0xff]
          %v567 = vld [vmem:[#allocation2 + $0x60] sm:$0xff]
          %v568 = vld [vmem:[#allocation2 + $0x68] sm:$0xff]
          %v569 = vld [vmem:[#allocation2 + $0x70] sm:$0xff]
          %v570 = vld [vmem:[#allocation2 + $0x78] sm:$0xff]
          %v571 = vld [vmem:[%s263] sm:$0x1]
          %v573 = vlaneseq
          %v574 = vshrl.u32 %v573, 7
          %v575 = vsub.s32 0, %v574
          %v576 = vrot.slane %v571, %v575
          %v578 = vadd.f32 %v555, %v576
          %v579 = vadd.f32 %v556, %v576
          %v580 = vadd.f32 %v557, %v576
          %v581 = vadd.f32 %v558, %v576
          %v582 = vadd.f32 %v559, %v576
          %v583 = vadd.f32 %v560, %v576
          %v584 = vadd.f32 %v561, %v576
          %v585 = vadd.f32 %v562, %v576
          %v586 = vadd.f32 %v563, %v576
          %v587 = vadd.f32 %v564, %v576
          %v588 = vadd.f32 %v565, %v576
          %v589 = vadd.f32 %v566, %v576
          %v590 = vadd.f32 %v567, %v576
          %v591 = vadd.f32 %v568, %v576
          %v592 = vadd.f32 %v569, %v576
          %v593 = vadd.f32 %v570, %v576
          %v594 = vmax.f32 %v578, 0.0
          %v595 = vmax.f32 %v579, 0.0
          %v596 = vmax.f32 %v580, 0.0
          %v597 = vmax.f32 %v581, 0.0
          %v598 = vmax.f32 %v582, 0.0
          %v599 = vmax.f32 %v583, 0.0
          %v600 = vmax.f32 %v584, 0.0
          %v601 = vmax.f32 %v585, 0.0
          %v602 = vmax.f32 %v586, 0.0
          %v603 = vmax.f32 %v587, 0.0
          %v604 = vmax.f32 %v588, 0.0
          %v605 = vmax.f32 %v589, 0.0
          %v606 = vmax.f32 %v590, 0.0
          %v607 = vmax.f32 %v591, 0.0
          %v608 = vmax.f32 %v592, 0.0
          %v609 = vmax.f32 %v593, 0.0
          %610 = vst [vmem:[%s294] sm:$0xff] %v594
          %611 = vst [vmem:[%s294 + $0x8] sm:$0xff] %v595
          %612 = vst [vmem:[%s294 + $0x10] sm:$0xff] %v596
          %613 = vst [vmem:[%s294 + $0x18] sm:$0xff] %v597
          %614 = vst [vmem:[%s294 + $0x20] sm:$0xff] %v598
          %615 = vst [vmem:[%s294 + $0x28] sm:$0xff] %v599
          %616 = vst [vmem:[%s294 + $0x30] sm:$0xff] %v600
          %617 = vst [vmem:[%s294 + $0x38] sm:$0xff] %v601
          %618 = vst [vmem:[%s294 + $0x40] sm:$0xff] %v602
          %619 = vst [vmem:[%s294 + $0x48] sm:$0xff] %v603
          %620 = vst [vmem:[%s294 + $0x50] sm:$0xff] %v604
          %621 = vst [vmem:[%s294 + $0x58] sm:$0xff] %v605
          %622 = vst [vmem:[%s294 + $0x60] sm:$0xff] %v606
          %623 = vst [vmem:[%s294 + $0x68] sm:$0xff] %v607
          %624 = vst [vmem:[%s294 + $0x70] sm:$0xff] %v608
          %625 = vst [vmem:[%s294 + $0x78] sm:$0xff] %v609
        $region52: #{tpu_custom_call.1} parent=31 // pred_fallthru
          _
        %s626 = sand.u32 %s134, 1
        %s627 = scalar_lea.sflag [#allocation5], %s626
        %s628 = sand.u32 %s134, 1
        %s629 = smul.addr %s628, 128
        %s630 = scalar_lea.vmem [#allocation9], %s629
        // Predicated region
        $region53: #{tpu_custom_call.1} parent=31 // pred_check
          %p631 = pneg %p144
        $region54: #{tpu_custom_call.1} parent=31 // pred_check_branch
          %633 = sbr.rel (%p631) target = $region56
        $region55: #{tpu_custom_call.1} parent=31 // pred_region
          %s634 = smul.u32 16, %s28
          %s635 = ssub.s32 25, %s634
          %p636 = scmp.lt.s32.totalorder %s635, 16
          %s637 = scalar_select %p636, %s635, 16
          %s638 = smul.u32 128, %s637
          %s640 = ssub.s32 2048, %s638
          %641 = vsyncadd %s627, %s640
          %p642 = scmp.ne.s32.totalorder 0, %s638
          %s643 = smul.addr %s634, 3
          %s644 = sadd.s32 %s29, %s643
          %s645 = smul.addr %s644, 128
          %s646 = scalar_lea.hbm %s3, %s645
          %s647 = smul.u32 8, %s637
          %s648 = sshll.u32 %s630, 4
          %s649 = int_to_ptr.vmem [resolvable:$true] %s648
          %s650 = sshll.u32 %s647, 4
          %654 = dma.vmem_to_hbm [thread:$0]  (%p642), %s649, %s650, %s646, %s627, 128, 384, 8
        $region56: #{tpu_custom_call.1} parent=31 // pred_fallthru
          _
      $region32: #{tpu_custom_call.1} parent=5 // pred_fallthru
        _
      %p655 = scmp.le.s32.totalorder 2, %s18
      // Predicated region
      $region57: #{tpu_custom_call.1} parent=5 // pred_check
        %p656 = pneg %p655
      $region58: #{tpu_custom_call.1} parent=5 // pred_check_branch
        %658 = sbr.rel (%p656) target = $region60
      $region59: #{tpu_custom_call.1} parent=5 // pred_region
        %s659 = ssub.s32 %s18, 2
        // Predicated region
        $region61: #{tpu_custom_call.1} parent=59 // pred_check
          %p660 = pneg %p150
        $region62: #{tpu_custom_call.1} parent=59 // pred_check_branch
          %662 = sbr.rel (%p660) target = $region64
        $region63: #{tpu_custom_call.1} parent=59 // pred_region
          %s663 = sand.u32 %s135, 1
          %s664 = scalar_lea.sflag [#allocation5], %s663
          %s665 = sand.u32 %s135, 1
          %s666 = smul.addr %s665, 128
          %s667 = scalar_lea.vmem [#allocation9], %s666
          %668 = dma.done %s664, 2048
        $region64: #{tpu_custom_call.1} parent=59 // pred_fallthru
          _
      $region60: #{tpu_custom_call.1} parent=5 // pred_fallthru
        _
    $region6: #{tpu_custom_call.1} parent=1 // loop_footer
      %s22 = sadd.s32 1, %s18
    $region7: #{tpu_custom_call.1} parent=1 // loop_footer_branch
      %17 = sbr.rel target = $region3
    $region8: #{tpu_custom_call.1} parent=1 // loop_exit
      _
    %669 = vsyncpa [#allocation4], 1
    %s670 = scalar_lea.sflag [#allocation4], 1
    %671 = vsyncpa %s670, 1
    %672 = vsyncpa [#allocation7], 1
    %s673 = scalar_lea.sflag [#allocation7], 1
    %674 = vsyncpa %s673, 1
    %675 = vsyncpa [#allocation5], 1
    %s676 = scalar_lea.sflag [#allocation5], 1
    %677 = vsyncpa %s676, 1

</llo_original>
